<compile_context>
chip_gen: v6e
topology: v6e:2x2x1
jax: 0.10.0
libtpu: 0.0.40
codegen_flags: <defaults>
</compile_context>

<pallas_src>
import functools

import jax
import jax.numpy as jnp
from jax.experimental import pallas as pl
from jax.experimental.pallas import tpu as pltpu


def _round_up(x: int, m: int) -> int:
    return (x + m - 1) // m * m


def _balanced_tile(dim: int, cap: int, align: int):
    """Split `dim` (after alignment padding) into equal-size tiles <= cap.

    Returns (tile, padded_total) with tile % align == 0, padded_total % tile == 0.
    Balancing avoids a nearly-empty trailing tile (wasted MXU work / re-reads).
    """
    padded = _round_up(max(dim, 1), align)
    n = -(-padded // cap)                       # number of tiles (ceil)
    tile = _round_up(-(-padded // n), align)    # balanced tile size
    return tile, n * tile


def _vmem_budget():
    """(scoped_vmem_limit_bytes, tile_budget_bytes) for the current chip.

    v7x has 64 MiB VMEM/TC -> ~48 MiB limit, ~40 MiB for double-buffered tiles.
    v5e/v6e have 128 MiB     -> ~96 MiB limit, ~88 MiB tile budget.
    """
    try:
        cap = int(getattr(pltpu.get_tpu_info(), "vmem_capacity_bytes", 64 << 20))
    except Exception:
        cap = 64 << 20                           # assume smallest (v7x) if unknown
    limit = min(cap * 3 // 4, 96 << 20)
    tile_budget = max(16 << 20, limit - (8 << 20))   # headroom for compiler scratch
    return limit, tile_budget


def linear_kernel(x_ref, w_ref, b_ref, o_ref):
    """One (tm, tn) output tile; accumulates over the K grid axis.

    x_ref: (tm, tk)   activation tile
    w_ref: (tn, tk)   weight tile in PyTorch (out, in) layout
    b_ref: (1, tn)    bias tile (indexed by N only)
    o_ref: (tm, tn)   f32 output tile -- resident across K, used as accumulator
    """
    k = pl.program_id(2)

    @pl.when(k == 0)
    def _():
        o_ref[...] = jnp.zeros_like(o_ref)

    # x @ W^T per tile: contract the K axes of both operands on the MXU.
    o_ref[...] += jax.lax.dot_general(
        x_ref[...], w_ref[...],
        dimension_numbers=(((1,), (1,)), ((), ())),
        preferred_element_type=jnp.float32,
    )

    @pl.when(k == pl.num_programs(2) - 1)
    def _():
        o_ref[...] += b_ref[...]


def make_linear(weight, bias):
    """Build a weight-stationary y = x @ weight.T + bias callable.

    weight: (out_f, in_f) f32 (PyTorch nn.Linear layout, NOT transposed)
    bias:   (out_f,)      f32
    Padding / packing of the parameters is done once here, not per call.
    """
    out_f, in_f = weight.shape
    vmem_limit, tile_budget = _vmem_budget()

    # N / K tiling (lane-dense multiples of 128, balanced, capped by budget).
    tn_cap = 2048 if tile_budget >= (64 << 20) else 1024
    tk, Kp = _balanced_tile(in_f, 1024, 128)
    tn, Np = _balanced_tile(out_f, tn_cap, 128)

    # v7x megacore: if there would be a single N tile, split it so both
    # TensorCores get a "parallel" output tile (cheap on 1-TC chips).
    if Np // tn < 2 and tn >= 256 and (tn // 2) % 128 == 0:
        tn //= 2

    # One-time parameter padding (zeros in K contribute nothing).
    w_p = weight
    if (Np, Kp) != (out_f, in_f):
        w_p = jnp.pad(weight, ((0, Np - out_f), (0, Kp - in_f)))
    b_p = bias if Np == out_f else jnp.pad(bias, (0, Np - out_f))
    b_p = b_p.reshape(1, Np)
    # TODO(synk): optionally store w_p/x in bf16 (keep f32 accumulation) for
    # ~2-4x MXU rate and half the weight HBM bytes, if the accuracy loss is OK.

    def _vmem_bytes(tm_):
        # double-buffered x + weight + output tiles, f32
        return 2 * 4 * (tm_ * tk + tn * tk + tm_ * tn)

    def _apply(x, w_pad, b_pad):
        B, in_f_x = x.shape
        assert in_f_x == in_f, "input feature dim mismatch"

        # M tiling: stream the weight through HBM exactly once when the whole
        # (padded) batch fits the VMEM budget; otherwise balanced blocking.
        Mp_full = _round_up(B, 8)
        if Mp_full <= 1024 and _vmem_bytes(Mp_full) <= tile_budget:
            tm, Mp = Mp_full, Mp_full
        else:
            cap = 512
            while cap > 8 and _vmem_bytes(cap) > tile_budget:
                cap //= 2
            tm, Mp = _balanced_tile(B, max(cap, 8), 8)

        x_p = x if (Mp == B and Kp == in_f) else jnp.pad(
            x, ((0, Mp - B), (0, Kp - in_f)))

        grid = (Mp // tm, Np // tn, Kp // tk)
        flops = 2 * Mp * Np * Kp
        bytes_accessed = 4 * (Mp * Kp + Np * Kp + Np + Mp * Np)

        out_padded = pl.pallas_call(
            linear_kernel,
            out_shape=jax.ShapeDtypeStruct((Mp, Np), jnp.float32),
            grid_spec=pltpu.PrefetchScalarGridSpec(
                num_scalar_prefetch=0,
                grid=grid,
                in_specs=[
                    pl.BlockSpec((tm, tk), lambda i, j, k: (i, k)),   # x
                    pl.BlockSpec((tn, tk), lambda i, j, k: (j, k)),   # weight (out,in)
                    pl.BlockSpec((1, tn), lambda i, j, k: (0, j)),    # bias
                ],
                out_specs=pl.BlockSpec((tm, tn), lambda i, j, k: (i, j)),
            ),
            compiler_params=pltpu.CompilerParams(
                dimension_semantics=("parallel", "parallel", "arbitrary"),
                vmem_limit_bytes=vmem_limit,
            ),
            cost_estimate=pl.CostEstimate(
                flops=flops, transcendentals=0, bytes_accessed=bytes_accessed),
        )(x_p, w_pad, b_pad)

        return out_padded[:B, :out_f]

    apply_jit = jax.jit(_apply)
    return lambda x: apply_jit(x, w_p, b_p)


if __name__ == "__main__":
    # Small shapes consistent with nn.Linear(in_features, out_features).
    B, in_features, out_features = 8, 32, 16

    key = jax.random.PRNGKey(0)
    kx, kw, kb = jax.random.split(key, 3)

    x = jax.random.normal(kx, (B, in_features), dtype=jnp.float32)
    bound = 1.0 / (in_features ** 0.5)
    weight = jax.random.uniform(kw, (out_features, in_features),
                                minval=-bound, maxval=bound, dtype=jnp.float32)
    bias = jax.random.uniform(kb, (out_features,),
                              minval=-bound, maxval=bound, dtype=jnp.float32)

    linear = make_linear(weight, bias)
    y = jax.block_until_ready(linear(x))

    y_ref = x @ weight.T + bias
    assert y.shape == y_ref.shape, "shape mismatch vs reference"
    assert jnp.allclose(y, y_ref, atol=1e-5, rtol=1e-5), "mismatch vs reference"

    # Shape that spans multiple N tiles (megacore split) and needs padding.
    B2, in2, out2 = 48, 300, 200
    k2x, k2w, k2b = jax.random.split(jax.random.PRNGKey(1), 3)
    x2 = jax.random.normal(k2x, (B2, in2), dtype=jnp.float32)
    w2 = jax.random.normal(k2w, (out2, in2), dtype=jnp.float32) * 0.05
    b2 = jax.random.normal(k2b, (out2,), dtype=jnp.float32)
    y2 = jax.block_until_ready(make_linear(w2, b2)(x2))
    y2_ref = x2 @ w2.T + b2
    assert jnp.allclose(y2, y2_ref, atol=1e-4, rtol=1e-4), "tiled mismatch"

    # Shape that spans multiple K tiles (exercises K-axis accumulation into o_ref).
    B3, in3, out3 = 300, 1200, 900
    k3x, k3w, k3b = jax.random.split(jax.random.PRNGKey(2), 3)
    x3 = jax.random.normal(k3x, (B3, in3), dtype=jnp.float32)
    w3 = jax.random.normal(k3w, (out3, in3), dtype=jnp.float32) * 0.05
    b3 = jax.random.normal(k3b, (out3,), dtype=jnp.float32)
    y3 = jax.block_until_ready(make_linear(w3, b3)(x3))
    y3_ref = x3 @ w3.T + b3
    assert jnp.allclose(y3, y3_ref, atol=1e-3, rtol=1e-3), "multi-K mismatch"

    print("KERNEL_OK")
</pallas_src>

<mosaic_0001>
module attributes {stable_mosaic.version = 11 : i64} {
  func.func @linear_kernel(%arg0: i32, %arg1: i32, %arg2: i32, %arg3: memref<8x128xf32, #tpu.memory_space<vmem>>, %arg4: memref<128x128xf32, #tpu.memory_space<vmem>>, %arg5: memref<1x128xf32, #tpu.memory_space<vmem>>, %arg6: memref<8x128xf32, #tpu.memory_space<vmem>>) attributes {dimension_semantics = [#tpu.dimension_semantics<parallel>, #tpu.dimension_semantics<parallel>, #tpu.dimension_semantics<arbitrary>], iteration_bounds = array<i64: 1, 1, 1>, scalar_prefetch = 0 : i64, scratch_operands = 0 : i64, tpu.core_type = #tpu.core_type<tc>, window_params = [{transform_indices = @transform_0, window_bounds = array<i64: 8, 128>}, {transform_indices = @transform_1, window_bounds = array<i64: 128, 128>}, {transform_indices = @transform_2, window_bounds = array<i64: 1, 128>}, {transform_indices = @transform_3, window_bounds = array<i64: 8, 128>}]} {
    %c0_i32 = arith.constant 0 : i32
    %0 = arith.cmpi eq, %arg2, %c0_i32 : i32
    %1 = arith.extui %0 : i1 to i32
    %c0_i32_0 = arith.constant 0 : i32
    %2 = arith.cmpi ne, %1, %c0_i32_0 : i32
    scf.if %2 {
      %cst_10 = arith.constant 0.000000e+00 : f32
      %12 = vector.broadcast %cst_10 : f32 to vector<8x128xf32>
      %c0_11 = arith.constant 0 : index
      %c0_12 = arith.constant 0 : index
      %13 = vector.load %arg6[%c0_11, %c0_12] : memref<8x128xf32, #tpu.memory_space<vmem>>, vector<8x128xf32>
      tpu.vector_store %arg6[%c0_11, %c0_12], %12 {strides = array<i32>} : memref<8x128xf32, #tpu.memory_space<vmem>>, vector<8x128xf32>,
    } else {
    }
    %c0 = arith.constant 0 : index
    %c0_1 = arith.constant 0 : index
    %3 = vector.load %arg6[%c0, %c0_1] : memref<8x128xf32, #tpu.memory_space<vmem>>, vector<8x128xf32>
    %c0_2 = arith.constant 0 : index
    %c0_3 = arith.constant 0 : index
    %4 = vector.load %arg3[%c0_2, %c0_3] : memref<8x128xf32, #tpu.memory_space<vmem>>, vector<8x128xf32>
    %c0_4 = arith.constant 0 : index
    %c0_5 = arith.constant 0 : index
    %5 = vector.load %arg4[%c0_4, %c0_5] : memref<128x128xf32, #tpu.memory_space<vmem>>, vector<128x128xf32>
    %cst = arith.constant dense<0.000000e+00> : vector<8x128xf32>
    %6 = tpu.matmul %4, %5, %cst {dimension_numbers = #tpu.dot_dimension_numbers<[1], [1], [0], [0], [0, 0, 1, 0], [], []>} : vector<8x128xf32>, vector<128x128xf32>, vector<8x128xf32> -> vector<8x128xf32>
    %7 = arith.addf %3, %6 : vector<8x128xf32>
    %c0_6 = arith.constant 0 : index
    %c0_7 = arith.constant 0 : index
    %8 = vector.load %arg6[%c0_6, %c0_7] : memref<8x128xf32, #tpu.memory_space<vmem>>, vector<8x128xf32>
    tpu.vector_store %arg6[%c0_6, %c0_7], %7 {strides = array<i32>} : memref<8x128xf32, #tpu.memory_space<vmem>>, vector<8x128xf32>,
    %c0_i32_8 = arith.constant 0 : i32
    %9 = arith.cmpi eq, %arg2, %c0_i32_8 : i32
    %10 = arith.extui %9 : i1 to i32
    %c0_i32_9 = arith.constant 0 : i32
    %11 = arith.cmpi ne, %10, %c0_i32_9 : i32
    scf.if %11 {
      %c0_10 = arith.constant 0 : index
      %c0_11 = arith.constant 0 : index
      %12 = vector.load %arg6[%c0_10, %c0_11] : memref<8x128xf32, #tpu.memory_space<vmem>>, vector<8x128xf32>
      %c0_12 = arith.constant 0 : index
      %c0_13 = arith.constant 0 : index
      %13 = vector.load %arg5[%c0_12, %c0_13] : memref<1x128xf32, #tpu.memory_space<vmem>>, vector<1x128xf32>
      %14 = vector.broadcast %13 : vector<1x128xf32> to vector<8x128xf32>
      %15 = arith.addf %12, %14 : vector<8x128xf32>
      %c0_14 = arith.constant 0 : index
      %c0_15 = arith.constant 0 : index
      %16 = vector.load %arg6[%c0_14, %c0_15] : memref<8x128xf32, #tpu.memory_space<vmem>>, vector<8x128xf32>
      tpu.vector_store %arg6[%c0_14, %c0_15], %15 {strides = array<i32>} : memref<8x128xf32, #tpu.memory_space<vmem>>, vector<8x128xf32>,
    } else {
    }
    return
  }
  func.func @transform_0(%arg0: i32, %arg1: i32, %arg2: i32) -> (i32, i32) {
    %c0_i32 = arith.constant 0 : i32
    return %arg0, %arg2 : i32, i32
  }
  func.func @transform_1(%arg0: i32, %arg1: i32, %arg2: i32) -> (i32, i32) {
    %c0_i32 = arith.constant 0 : i32
    return %arg1, %arg2 : i32, i32
  }
  func.func @transform_2(%arg0: i32, %arg1: i32, %arg2: i32) -> (i32, i32) {
    %c0_i32 = arith.constant 0 : i32
    %c0_i32_0 = arith.constant 0 : i32
    return %c0_i32, %arg1 : i32, i32
  }
  func.func @transform_3(%arg0: i32, %arg1: i32, %arg2: i32) -> (i32, i32) {
    %c0_i32 = arith.constant 0 : i32
    return %arg0, %arg1 : i32, i32
  }
}

</mosaic_0001>

<llo_original>
// kernel: _apply.1
$region0: #{_apply.1}
  #allocation0 [shape = 'u32[]', space=smem, size = 0x4, offset = 0x4, fixed_abs, tag = 'smem constant byte address 0x4 - core index']
  #allocation1 [shape = 'u32[144,128]{1,0:T(1,128)}', space=vmem, size = 0x12000, scoped, tag = 'internal scratch']
  %s0 = inlined_call_operand.vmem [shape: f32[8,128], index: 0, kind: input, shape index: {}]
  %s1 = inlined_call_operand.hbm [shape: f32[128,128], index: 1, kind: input, shape index: {}]
  %s2 = inlined_call_operand.vmem [shape: f32[1,128], index: 2, kind: input, shape index: {}]
  %s3 = inlined_call_operand.hbm [shape: f32[8,128], index: 3, kind: output, shape index: {}]
  %s4 = sld [smem:[#allocation0]]
  $region34: #{_apply.1} parent=0
    _
  %s6 = ssub.s32 1, %s4
  %s7 = scalar_select 0, %s6, %s4
  $region1: #{_apply.1} parent=0
    #allocation2 [shape = 'u8[65536]{0}', space=vmem, size = 0x10000, scoped, tag = 'input window, operand 1, single buffered']
    #allocation3 [shape = 's32[1]{0}', space=sflag, size = 0x4, scoped, tag = 'scoped memory for _apply.1']
    #allocation4 [shape = 's32[1]{0}', space=sflag, size = 0x4, scoped, tag = 'scoped memory for _apply.1']
    #allocation5 [shape = 'u8[4096]{0}', space=vmem, size = 0x1000, scoped, tag = 'output window, operand 0, single buffered']
    %8 = vsyncpa [#allocation3], 0
    %9 = vsyncpa [#allocation4], 0
    // Predicated region
    $region2: #{_apply.1} parent=1 // pred_check
      _
    $region3: #{_apply.1} parent=1 // pred_check_branch
      %11 = sbr.rel (0) target = $region5
    $region4: #{_apply.1} parent=1 // pred_region
      _
    $region5: #{_apply.1} parent=1 // pred_fallthru
      _
    // Predicated region
    $region6: #{_apply.1} parent=1 // pred_check
      _
    $region7: #{_apply.1} parent=1 // pred_check_branch
      %13 = sbr.rel (0) target = $region9
    $region8: #{_apply.1} parent=1 // pred_region
      %s15 = ssub.s32 2048, 2048
      %16 = vsyncadd [#allocation3], %s15
      %s17 = sshll.u32 [#allocation2], 4
      %s18 = int_to_ptr.vmem [resolvable:$true] %s17
      %23 = dma.hbm_to_vmem [thread:$0]  %s1, 2048, %s18, [#allocation3], 128, 128, 8
    $region9: #{_apply.1} parent=1 // pred_fallthru
      _
    // Predicated region
    $region10: #{_apply.1} parent=1 // pred_check
      _
    $region11: #{_apply.1} parent=1 // pred_check_branch
      %25 = sbr.rel (0) target = $region13
    $region12: #{_apply.1} parent=1 // pred_region
      _
    $region13: #{_apply.1} parent=1 // pred_fallthru
      _
    // Predicated region
    $region14: #{_apply.1} parent=1 // pred_check
      _
    $region15: #{_apply.1} parent=1 // pred_check_branch
      %27 = sbr.rel (0) target = $region17
    $region16: #{_apply.1} parent=1 // pred_region
      %28 = dma.done [#allocation3], 2048
    $region17: #{_apply.1} parent=1 // pred_fallthru
      _
    %p29 = scmp.eq.s32.totalorder 0, 0
    // Predicated region
    $region18: #{_apply.1} parent=1 // pred_check
      %p30 = pneg %p29
    $region19: #{_apply.1} parent=1 // pred_check_branch
      %32 = sbr.rel (%p30) target = $region21
    $region20: #{_apply.1} parent=1 // pred_region
      %33 = vst [vmem:[#allocation5] sm:$0xff] 0.0
    $region21: #{_apply.1} parent=1 // pred_fallthru
      _
    %v34 = vld [vmem:[#allocation5] sm:$0xff]
    %v35 = vld [vmem:[%s0] sm:$0xff]
    %v36 = vld [vmem:[#allocation2] sm:$0xff]
    %v37 = vld [vmem:[#allocation2 + $0x8] sm:$0xff]
    %v38 = vld [vmem:[#allocation2 + $0x10] sm:$0xff]
    %v39 = vld [vmem:[#allocation2 + $0x18] sm:$0xff]
    %v40 = vld [vmem:[#allocation2 + $0x20] sm:$0xff]
    %v41 = vld [vmem:[#allocation2 + $0x28] sm:$0xff]
    %v42 = vld [vmem:[#allocation2 + $0x30] sm:$0xff]
    %v43 = vld [vmem:[#allocation2 + $0x38] sm:$0xff]
    %v44 = vld [vmem:[#allocation2 + $0x40] sm:$0xff]
    %v45 = vld [vmem:[#allocation2 + $0x48] sm:$0xff]
    %v46 = vld [vmem:[#allocation2 + $0x50] sm:$0xff]
    %v47 = vld [vmem:[#allocation2 + $0x58] sm:$0xff]
    %v48 = vld [vmem:[#allocation2 + $0x60] sm:$0xff]
    %v49 = vld [vmem:[#allocation2 + $0x68] sm:$0xff]
    %v50 = vld [vmem:[#allocation2 + $0x70] sm:$0xff]
    %v51 = vld [vmem:[#allocation2 + $0x78] sm:$0xff]
    %52 = vmatprep.subr.mxu0 0.0
    %53 = vmatpush1.xpose.msra.mxu0 %v51
    %54 = vmatprep.subr.mxu0 0.0
    %55 = vmatpush1.xpose.msra.mxu0 %v50
    %56 = vmatprep.subr.mxu0 0.0
    %57 = vmatpush1.xpose.msra.mxu0 %v49
    %58 = vmatprep.subr.mxu0 0.0
    %59 = vmatpush1.xpose.msra.mxu0 %v48
    %60 = vmatprep.subr.mxu0 0.0
    %61 = vmatpush1.xpose.msra.mxu0 %v47
    %62 = vmatprep.subr.mxu0 0.0
    %63 = vmatpush1.xpose.msra.mxu0 %v46
    %64 = vmatprep.subr.mxu0 0.0
    %65 = vmatpush1.xpose.msra.mxu0 %v45
    %66 = vmatprep.subr.mxu0 0.0
    %67 = vmatpush1.xpose.msra.mxu0 %v44
    %68 = vmatprep.subr.mxu0 0.0
    %69 = vmatpush1.xpose.msra.mxu0 %v43
    %70 = vmatprep.subr.mxu0 0.0
    %71 = vmatpush1.xpose.msra.mxu0 %v42
    %72 = vmatprep.subr.mxu0 0.0
    %73 = vmatpush1.xpose.msra.mxu0 %v41
    %74 = vmatprep.subr.mxu0 0.0
    %75 = vmatpush1.xpose.msra.mxu0 %v40
    %76 = vmatprep.subr.mxu0 0.0
    %77 = vmatpush1.xpose.msra.mxu0 %v39
    %78 = vmatprep.subr.mxu0 0.0
    %79 = vmatpush1.xpose.msra.mxu0 %v38
    %80 = vmatprep.subr.mxu0 0.0
    %81 = vmatpush1.xpose.msra.mxu0 %v37
    %82 = vmatprep.subr.mxu0 0.0
    %83 = vmatpush1.xpose.msra.mxu0 %v36
    %84 = vmatprep.subr.mxu0 0.0
    %85 = vmatpush2.xpose.msra.mxu0 0.0
    %86 = vmatprep.subr.mxu0 0.0
    %87 = vmatpush2.xpose.msra.mxu0 0.0
    %88 = vmatprep.subr.mxu0 0.0
    %89 = vmatpush2.xpose.msra.mxu0 0.0
    %90 = vmatprep.subr.mxu0 0.0
    %91 = vmatpush2.xpose.msra.mxu0 0.0
    %92 = vmatprep.subr.mxu0 0.0
    %93 = vmatpush2.xpose.msra.mxu0 0.0
    %94 = vmatprep.subr.mxu0 0.0
    %95 = vmatpush2.xpose.msra.mxu0 0.0
    %96 = vmatprep.subr.mxu0 0.0
    %97 = vmatpush2.xpose.msra.mxu0 0.0
    %98 = vmatprep.subr.mxu0 0.0
    %99 = vmatpush2.xpose.msra.mxu0 0.0
    %100 = vmatprep.subr.mxu0 0.0
    %101 = vmatpush2.xpose.msra.mxu0 0.0
    %102 = vmatprep.subr.mxu0 0.0
    %103 = vmatpush2.xpose.msra.mxu0 0.0
    %104 = vmatprep.subr.mxu0 0.0
    %105 = vmatpush2.xpose.msra.mxu0 0.0
    %106 = vmatprep.subr.mxu0 0.0
    %107 = vmatpush2.xpose.msra.mxu0 0.0
    %108 = vmatprep.subr.mxu0 0.0
    %109 = vmatpush2.xpose.msra.mxu0 0.0
    %110 = vmatprep.subr.mxu0 0.0
    %111 = vmatpush2.xpose.msra.mxu0 0.0
    %112 = vmatprep.subr.mxu0 0.0
    %113 = vmatpush2.xpose.msra.mxu0 0.0
    %114 = vmatprep.subr.mxu0 0.0
    %115 = vmatpush2.xpose.msra.mxu0 0.0
    %116 = vmatprep.mubr.f32.mxu0 0.0
    %117 = vmatmul.mubr.f32.gmra.mxu0 %v35
    %v118 = vpop.f32.mrf.mxu0
    %v119 = vadd.f32 0.0, %v118
    %v120 = vpop.f32.mrf.mxu0
    %121 = vdwg.mxu0
    %v122 = vadd.f32 %v34, %v119
    %123 = vst [vmem:[#allocation5] sm:$0xff] %v122
    // Predicated region
    $region22: #{_apply.1} parent=1 // pred_check
      %p124 = pneg %p29
    $region23: #{_apply.1} parent=1 // pred_check_branch
      %126 = sbr.rel (%p124) target = $region25
    $region24: #{_apply.1} parent=1 // pred_region
      %v127 = vld [vmem:[#allocation5] sm:$0xff]
      %v128 = vld [vmem:[%s2] sm:$0x1]
      %v130 = vlaneseq
      %v131 = vshrl.u32 %v130, 7
      %v132 = vsub.s32 0, %v131
      %v133 = vrot.slane %v128, %v132
      %v135 = vadd.f32 %v127, %v133
      %136 = vst [vmem:[#allocation5] sm:$0xff] %v135
    $region25: #{_apply.1} parent=1 // pred_fallthru
      _
    // Predicated region
    $region26: #{_apply.1} parent=1 // pred_check
      _
    $region27: #{_apply.1} parent=1 // pred_check_branch
      %138 = sbr.rel (0) target = $region29
    $region28: #{_apply.1} parent=1 // pred_region
      %s140 = ssub.s32 128, 128
      %141 = vsyncadd [#allocation4], %s140
      %s143 = sshll.u32 [#allocation5], 4
      %s144 = int_to_ptr.vmem [resolvable:$true] %s143
      %146 = dma.vmem_to_hbm [thread:$0]  %s144, 128, %s3, [#allocation4]
    $region29: #{_apply.1} parent=1 // pred_fallthru
      _
    // Predicated region
    $region30: #{_apply.1} parent=1 // pred_check
      _
    $region31: #{_apply.1} parent=1 // pred_check_branch
      %148 = sbr.rel (0) target = $region33
    $region32: #{_apply.1} parent=1 // pred_region
      %149 = dma.done [#allocation4], 128
    $region33: #{_apply.1} parent=1 // pred_fallthru
      _
    %150 = vsyncpa [#allocation3], 1
    %151 = vsyncpa [#allocation4], 1

</llo_original>
